<compile_context>
chip_gen: v7x
topology: tpu7x:2x2x1
jax: 0.10.0
libtpu: 0.0.40
codegen_flags: <defaults>
</compile_context>

<pallas_src>
import jax
import jax.numpy as jnp
from jax.experimental import pallas as pl
from jax.experimental.pallas import tpu as pltpu


def _pick_block_rows(n, bytes_per_sample, *, target_bytes=2 << 20):
    """Largest divisor of n whose block-set stays under target, keeping grid >= 2."""
    cap = max(1, target_bytes // max(1, bytes_per_sample))
    if n >= 2:
        cap = min(cap, pl.cdiv(n, 2))  # keep >=2 grid steps for v7x megacore sharding
    best = 1
    for d in range(1, n + 1):
        if n % d == 0 and d <= cap:
            best = d
    return best


def _concat_rgbd_pallas(pairs, *, normalize_depth, depth_mean, depth_std_dev):
    """Fused RGBD concat (+ optional depth normalization) for K (img, depth) pairs.

    pairs: list of (img (N,3,H,W), depth (N,1,H,W)), all with identical shapes.
    Returns: list of (N,4,H,W) arrays, one per pair, from a single pallas_call.
    """
    K = len(pairs)
    N, C, H, W = pairs[0][0].shape
    assert C == 3
    dtype = pairs[0][0].dtype
    for img, depth in pairs:
        assert img.shape == (N, 3, H, W) and depth.shape == (N, 1, H, W)
        assert img.dtype == dtype and depth.dtype == dtype
    HW = H * W

    mean = float(depth_mean)
    std = float(depth_std_dev)
    do_norm = bool(normalize_depth)  # static; baked into the traced kernel

    # ---- block sizing: batch samples per grid step, lane-dense last dim ----
    itemsize = jnp.dtype(dtype).itemsize
    bytes_per_sample = K * (3 + 1 + 4) * HW * itemsize  # img + depth + out, all sides
    nb = _pick_block_rows(N, bytes_per_sample)
    grid = (N // nb,)
    block_set_bytes = nb * bytes_per_sample
    # Headroom for double-buffering; stays sane on v5e (16 MiB scoped default)
    # and v7x (64 MiB physical).
    vmem_limit = min(48 << 20, max(16 << 20, 4 * block_set_bytes + (2 << 20)))

    def kernel(*refs):
        in_refs, out_refs = refs[: 2 * K], refs[2 * K :]
        for k in range(K):
            img_ref = in_refs[2 * k]
            depth_ref = in_refs[2 * k + 1]
            out_ref = out_refs[k]
            # RGB channels -> channels [0,3). Lane-dense (full H*W) stores.
            out_ref[:, 0:3, :] = img_ref[...]
            # Depth channel -> channel 3, normalization fused into the write.
            d = depth_ref[...]  # (nb, 1, HW)
            if do_norm:
                d = (d - mean) / std  # division: bit-matches the reference
            out_ref[:, 3:4, :] = d

    in_specs = []
    args = []
    for img, depth in pairs:
        in_specs.append(pl.BlockSpec((nb, 3, HW), lambda b: (b, 0, 0)))
        in_specs.append(pl.BlockSpec((nb, 1, HW), lambda b: (b, 0, 0)))
        args.append(img.reshape(N, 3, HW))
        args.append(depth.reshape(N, 1, HW))

    out_specs = [pl.BlockSpec((nb, 4, HW), lambda b: (b, 0, 0)) for _ in range(K)]
    out_shape = tuple(jax.ShapeDtypeStruct((N, 4, HW), dtype) for _ in range(K))

    outs = pl.pallas_call(
        kernel,
        out_shape=out_shape,
        grid=grid,
        in_specs=in_specs,
        out_specs=out_specs,
        compiler_params=pltpu.CompilerParams(
            dimension_semantics=("parallel",),
            vmem_limit_bytes=vmem_limit,
        ),
    )(*args)

    return [o.reshape(N, 4, H, W) for o in outs]


class ConcatenateRGBD:
    """JAX/Pallas port of networks/concatenate_rgbd.py::ConcatenateRGBD."""

    def __init__(self, normalize_depth=False, **kwargs):
        self.num_ch_enc = 4
        self.normalize_depth = normalize_depth
        self.depth_mean = 5
        self.depth_std_dev = 1.667

    def forward(self, inputs, features):
        sides = ["l", "r"]
        pairs = []
        for side in sides:
            img = inputs[("color_aug", side, 0)]
            img = img.reshape((-1, *img.shape[2:]))  # collapse leading two dims
            depth = features[("depth", side, 0)]
            pairs.append((img, depth))

        outputs = {}
        if not self.normalize_depth:
            # No fused compute -> XLA's concat is already a roofline memcpy.
            for side, (img, depth) in zip(sides, pairs):
                outputs[("rgbd_features", side, 0)] = jnp.concatenate([img, depth], axis=1)
            return outputs

        same_shapes = all(
            p[0].shape == pairs[0][0].shape and p[1].shape == pairs[0][1].shape
            for p in pairs
        )
        if same_shapes:
            # Single fused pallas_call covering both sides (one dispatch).
            rgbds = _concat_rgbd_pallas(
                pairs,
                normalize_depth=self.normalize_depth,
                depth_mean=self.depth_mean,
                depth_std_dev=self.depth_std_dev,
            )
            for side, rgbd in zip(sides, rgbds):
                outputs[("rgbd_features", side, 0)] = rgbd
        else:
            # Fallback: one call per side if the two sides differ in shape.
            for side, pair in zip(sides, pairs):
                outputs[("rgbd_features", side, 0)] = _concat_rgbd_pallas(
                    [pair],
                    normalize_depth=self.normalize_depth,
                    depth_mean=self.depth_mean,
                    depth_std_dev=self.depth_std_dev,
                )[0]
        return outputs


def _reference(inputs, features, normalize_depth, depth_mean, depth_std_dev):
    outputs = {}
    for side in ["l", "r"]:
        img = inputs[("color_aug", side, 0)]
        img = img.reshape((-1, *img.shape[2:]))
        depth = features[("depth", side, 0)]
        if normalize_depth:
            depth = (depth - depth_mean) / depth_std_dev
        outputs[("rgbd_features", side, 0)] = jnp.concatenate([img, depth], axis=1)
    return outputs


if __name__ == "__main__":
    key = jax.random.PRNGKey(0)
    B, S, C, H, W = 2, 2, 3, 16, 16  # img has 5 dims -> reshape collapses (B, S)
    N = B * S

    keys = jax.random.split(key, 4)
    inputs = {
        ("color_aug", "l", 0): jax.random.uniform(keys[0], (B, S, C, H, W), jnp.float32),
        ("color_aug", "r", 0): jax.random.uniform(keys[1], (B, S, C, H, W), jnp.float32),
    }
    features = {
        ("depth", "l", 0): jax.random.uniform(keys[2], (N, 1, H, W), jnp.float32) * 10.0,
        ("depth", "r", 0): jax.random.uniform(keys[3], (N, 1, H, W), jnp.float32) * 10.0,
    }

    # Pallas path (normalize_depth=True)
    module = ConcatenateRGBD(normalize_depth=True)
    outputs = module.forward(inputs, features)
    jax.block_until_ready(outputs)

    ref = _reference(inputs, features, True, module.depth_mean, module.depth_std_dev)
    for k in outputs:
        assert outputs[k].shape == (N, 4, H, W), outputs[k].shape
        assert jnp.allclose(outputs[k], ref[k], atol=1e-6, rtol=1e-6)

    # Bypass path (normalize_depth=False) -- plain jnp concat, no Pallas call.
    module_nn = ConcatenateRGBD(normalize_depth=False)
    outputs_nn = module_nn.forward(inputs, features)
    jax.block_until_ready(outputs_nn)
    ref_nn = _reference(inputs, features, False, module_nn.depth_mean, module_nn.depth_std_dev)
    for k in outputs_nn:
        assert jnp.allclose(outputs_nn[k], ref_nn[k], atol=1e-6, rtol=1e-6)

    print("KERNEL_OK")
</pallas_src>

<mosaic_0001>
module attributes {stable_mosaic.version = 11 : i64} {
  func.func @kernel(%arg0: i32, %arg1: memref<2x3x256xf32, #tpu.memory_space<vmem>>, %arg2: memref<2x1x256xf32, #tpu.memory_space<vmem>>, %arg3: memref<2x3x256xf32, #tpu.memory_space<vmem>>, %arg4: memref<2x1x256xf32, #tpu.memory_space<vmem>>, %arg5: memref<2x4x256xf32, #tpu.memory_space<vmem>>, %arg6: memref<2x4x256xf32, #tpu.memory_space<vmem>>) attributes {dimension_semantics = [#tpu.dimension_semantics<parallel>], iteration_bounds = array<i64: 2>, scalar_prefetch = 0 : i64, scratch_operands = 0 : i64, tpu.core_type = #tpu.core_type<tc>, window_params = [{transform_indices = @transform_0, window_bounds = array<i64: 2, 3, 256>}, {transform_indices = @transform_1, window_bounds = array<i64: 2, 1, 256>}, {transform_indices = @transform_2, window_bounds = array<i64: 2, 3, 256>}, {transform_indices = @transform_3, window_bounds = array<i64: 2, 1, 256>}, {transform_indices = @transform_4, window_bounds = array<i64: 2, 4, 256>}, {transform_indices = @transform_5, window_bounds = array<i64: 2, 4, 256>}]} {
    %c0 = arith.constant 0 : index
    %c0_0 = arith.constant 0 : index
    %c0_1 = arith.constant 0 : index
    %0 = vector.load %arg1[%c0, %c0_0, %c0_1] : memref<2x3x256xf32, #tpu.memory_space<vmem>>, vector<2x3x256xf32>
    %c0_2 = arith.constant 0 : index
    %c0_3 = arith.constant 0 : index
    %c0_4 = arith.constant 0 : index
    %1 = vector.load %arg5[%c0_2, %c0_3, %c0_4] : memref<2x4x256xf32, #tpu.memory_space<vmem>>, vector<2x3x256xf32>
    tpu.vector_store %arg5[%c0_2, %c0_3, %c0_4], %0 {strides = array<i32>} : memref<2x4x256xf32, #tpu.memory_space<vmem>>, vector<2x3x256xf32>,
    %c0_5 = arith.constant 0 : index
    %c0_6 = arith.constant 0 : index
    %c0_7 = arith.constant 0 : index
    %2 = vector.load %arg2[%c0_5, %c0_6, %c0_7] : memref<2x1x256xf32, #tpu.memory_space<vmem>>, vector<2x1x256xf32>
    %cst = arith.constant 5.000000e+00 : f32
    %3 = vector.broadcast %cst : f32 to vector<2x1x256xf32>
    %4 = arith.subf %2, %3 : vector<2x1x256xf32>
    %cst_8 = arith.constant 1.667000e+00 : f32
    %5 = vector.broadcast %cst_8 : f32 to vector<2x1x256xf32>
    %6 = arith.divf %4, %5 : vector<2x1x256xf32>
    %c0_9 = arith.constant 0 : index
    %c3 = arith.constant 3 : index
    %c0_10 = arith.constant 0 : index
    %7 = vector.load %arg5[%c0_9, %c3, %c0_10] : memref<2x4x256xf32, #tpu.memory_space<vmem>>, vector<2x1x256xf32>
    tpu.vector_store %arg5[%c0_9, %c3, %c0_10], %6 {strides = array<i32>} : memref<2x4x256xf32, #tpu.memory_space<vmem>>, vector<2x1x256xf32>,
    %c0_11 = arith.constant 0 : index
    %c0_12 = arith.constant 0 : index
    %c0_13 = arith.constant 0 : index
    %8 = vector.load %arg3[%c0_11, %c0_12, %c0_13] : memref<2x3x256xf32, #tpu.memory_space<vmem>>, vector<2x3x256xf32>
    %c0_14 = arith.constant 0 : index
    %c0_15 = arith.constant 0 : index
    %c0_16 = arith.constant 0 : index
    %9 = vector.load %arg6[%c0_14, %c0_15, %c0_16] : memref<2x4x256xf32, #tpu.memory_space<vmem>>, vector<2x3x256xf32>
    tpu.vector_store %arg6[%c0_14, %c0_15, %c0_16], %8 {strides = array<i32>} : memref<2x4x256xf32, #tpu.memory_space<vmem>>, vector<2x3x256xf32>,
    %c0_17 = arith.constant 0 : index
    %c0_18 = arith.constant 0 : index
    %c0_19 = arith.constant 0 : index
    %10 = vector.load %arg4[%c0_17, %c0_18, %c0_19] : memref<2x1x256xf32, #tpu.memory_space<vmem>>, vector<2x1x256xf32>
    %cst_20 = arith.constant 5.000000e+00 : f32
    %11 = vector.broadcast %cst_20 : f32 to vector<2x1x256xf32>
    %12 = arith.subf %10, %11 : vector<2x1x256xf32>
    %cst_21 = arith.constant 1.667000e+00 : f32
    %13 = vector.broadcast %cst_21 : f32 to vector<2x1x256xf32>
    %14 = arith.divf %12, %13 : vector<2x1x256xf32>
    %c0_22 = arith.constant 0 : index
    %c3_23 = arith.constant 3 : index
    %c0_24 = arith.constant 0 : index
    %15 = vector.load %arg6[%c0_22, %c3_23, %c0_24] : memref<2x4x256xf32, #tpu.memory_space<vmem>>, vector<2x1x256xf32>
    tpu.vector_store %arg6[%c0_22, %c3_23, %c0_24], %14 {strides = array<i32>} : memref<2x4x256xf32, #tpu.memory_space<vmem>>, vector<2x1x256xf32>,
    return
  }
  func.func @transform_0(%arg0: i32) -> (i32, i32, i32) {
    %c0_i32 = arith.constant 0 : i32
    %c0_i32_0 = arith.constant 0 : i32
    %c0_i32_1 = arith.constant 0 : i32
    return %arg0, %c0_i32, %c0_i32_0 : i32, i32, i32
  }
  func.func @transform_1(%arg0: i32) -> (i32, i32, i32) {
    %c0_i32 = arith.constant 0 : i32
    %c0_i32_0 = arith.constant 0 : i32
    %c0_i32_1 = arith.constant 0 : i32
    return %arg0, %c0_i32, %c0_i32_0 : i32, i32, i32
  }
  func.func @transform_2(%arg0: i32) -> (i32, i32, i32) {
    %c0_i32 = arith.constant 0 : i32
    %c0_i32_0 = arith.constant 0 : i32
    %c0_i32_1 = arith.constant 0 : i32
    return %arg0, %c0_i32, %c0_i32_0 : i32, i32, i32
  }
  func.func @transform_3(%arg0: i32) -> (i32, i32, i32) {
    %c0_i32 = arith.constant 0 : i32
    %c0_i32_0 = arith.constant 0 : i32
    %c0_i32_1 = arith.constant 0 : i32
    return %arg0, %c0_i32, %c0_i32_0 : i32, i32, i32
  }
  func.func @transform_4(%arg0: i32) -> (i32, i32, i32) {
    %c0_i32 = arith.constant 0 : i32
    %c0_i32_0 = arith.constant 0 : i32
    %c0_i32_1 = arith.constant 0 : i32
    return %arg0, %c0_i32, %c0_i32_0 : i32, i32, i32
  }
  func.func @transform_5(%arg0: i32) -> (i32, i32, i32) {
    %c0_i32 = arith.constant 0 : i32
    %c0_i32_0 = arith.constant 0 : i32
    %c0_i32_1 = arith.constant 0 : i32
    return %arg0, %c0_i32, %c0_i32_0 : i32, i32, i32
  }
}

</mosaic_0001>

<llo_original>
// kernel: tpu_custom_call.1
$region0: #{tpu_custom_call.1}
  #allocation0 [shape = 'u32[]', space=smem, size = 0x4, offset = 0x4, fixed_abs, tag = 'smem constant byte address 0x4 - core index']
  #allocation1 [shape = 'u32[144,128]{1,0:T(1,128)}', space=vmem, size = 0x12000, scoped, tag = 'internal scratch']
  %s0 = inlined_call_operand.vmem [shape: f32[4,3,256], index: 0, kind: input, shape index: {}]
  %s1 = inlined_call_operand.vmem [shape: f32[4,1,256], index: 1, kind: input, shape index: {}]
  %s2 = inlined_call_operand.vmem [shape: f32[4,3,256], index: 2, kind: input, shape index: {}]
  %s3 = inlined_call_operand.vmem [shape: f32[4,1,256], index: 3, kind: input, shape index: {}]
  %s4 = inlined_call_operand.hbm [shape: f32[4,4,256], index: 4, kind: output, shape index: {0}]
  %s5 = inlined_call_operand.hbm [shape: f32[4,4,256], index: 5, kind: output, shape index: {1}]
  %6 = xla_tuple %s4, %s5
  %s7 = sld [smem:[#allocation0]]
  $region57: #{tpu_custom_call.1} parent=0
    _
  %s9 = ssub.s32 1, %s7
  %s10 = scalar_select 0, %s9, %s7
  $region1: #{tpu_custom_call.1} parent=0
    #allocation2 [shape = 'u8[16384]{0}', space=vmem, size = 0x4000, scoped, tag = 'output window, operand 0']
    #allocation3 [shape = 's32[2]{0}', space=sflag, size = 0x8, scoped, tag = 'scoped memory for tpu_custom_call.1']
    #allocation4 [shape = 'u8[16384]{0}', space=vmem, size = 0x4000, scoped, tag = 'output window, operand 1']
    #allocation5 [shape = 's32[2]{0}', space=sflag, size = 0x8, scoped, tag = 'scoped memory for tpu_custom_call.1']
    %11 = vsyncpa [#allocation3], 0
    %s12 = scalar_lea.sflag [#allocation3], 1
    %13 = vsyncpa %s12, 0
    %14 = vsyncpa [#allocation5], 0
    %s15 = scalar_lea.sflag [#allocation5], 1
    %16 = vsyncpa %s15, 0
    loop: start=0, step=1, limit=4
    $region2: #{tpu_custom_call.1} parent=1 // loop_pre_header
      _
    $region3: #{tpu_custom_call.1} parent=1 // loop_header
      %s18 = sphi 0, %s22
      %p19 = scmp.ge.s32.totalorder %s18, 4
      %s28 = sphi 0, %s30
      %s31 = sphi 0, %s28
      %s32 = sphi 0, %s31
      %s48 = sphi 0, %s32
      %s54 = sphi 0, %s56
      %s57 = sphi 0, %s54
      %s58 = sphi 0, %s57
      %s74 = sphi 0, %s58
      %s80 = sphi 0, %s82
      %s83 = sphi 0, %s80
      %s84 = sphi 0, %s83
      %s100 = sphi 0, %s84
      %s106 = sphi 0, %s108
      %s109 = sphi 0, %s106
      %s110 = sphi 0, %s109
      %s126 = sphi 0, %s110
      %s132 = sphi 0, %s134
      %s135 = sphi 0, %s132
      %s136 = sphi 0, %s135
      %s152 = sphi 0, %s136
      %s158 = sphi 0, %s160
      %s161 = sphi 0, %s158
      %s162 = sphi 0, %s161
      %s178 = sphi 0, %s162
    $region4: #{tpu_custom_call.1} parent=1 // loop_header_branch
      %21 = sbr.rel (%p19) target = $region8
    $region5: #{tpu_custom_call.1} parent=1 // loop_body
      %s23 = ssub.s32 %s18, 1
      %s24 = ssub.s32 %s18, 2
      %s25 = sadd.s32 %s18, 1
      %s26 = ssub.s32 %s18, %s25
      %p27 = scmp.eq.s32.totalorder %s26, 0
      %s29 = sadd.s32 %s28, 1
      %s30 = scalar_select %p27, %s28, %s29
      %p33 = pneg %p27
      %p34 = scmp.eq.s32.totalorder %s18, 1
      %p35 = por %p33, %p34
      %p36 = scmp.ne.s32.totalorder %s28, %s31
      %p37 = scmp.eq.s32.totalorder %s18, 0
      %p38 = por %p36, %p37
      %p39 = scmp.ne.s32.totalorder %s28, %s31
      %p40 = scmp.eq.s32.totalorder %s23, 1
      %p41 = por %p39, %p40
      %p42 = scmp.ne.s32.totalorder %s31, %s32
      %p43 = scmp.eq.s32.totalorder %s23, 0
      %p44 = por %p42, %p43
      %p45 = scmp.ne.s32.totalorder %s31, %s32
      %p46 = scmp.eq.s32.totalorder %s24, 1
      %p47 = por %p45, %p46
      %p49 = scmp.ne.s32.totalorder %s32, %s48
      %p50 = scmp.eq.s32.totalorder %s24, 0
      %p51 = por %p49, %p50
      %s52 = ssub.s32 %s18, %s25
      %p53 = scmp.eq.s32.totalorder %s52, 0
      %s55 = sadd.s32 %s54, 1
      %s56 = scalar_select %p53, %s54, %s55
      %p59 = pneg %p53
      %p60 = scmp.eq.s32.totalorder %s18, 1
      %p61 = por %p59, %p60
      %p62 = scmp.ne.s32.totalorder %s54, %s57
      %p63 = scmp.eq.s32.totalorder %s18, 0
      %p64 = por %p62, %p63
      %p65 = scmp.ne.s32.totalorder %s54, %s57
      %p66 = scmp.eq.s32.totalorder %s23, 1
      %p67 = por %p65, %p66
      %p68 = scmp.ne.s32.totalorder %s57, %s58
      %p69 = scmp.eq.s32.totalorder %s23, 0
      %p70 = por %p68, %p69
      %p71 = scmp.ne.s32.totalorder %s57, %s58
      %p72 = scmp.eq.s32.totalorder %s24, 1
      %p73 = por %p71, %p72
      %p75 = scmp.ne.s32.totalorder %s58, %s74
      %p76 = scmp.eq.s32.totalorder %s24, 0
      %p77 = por %p75, %p76
      %s78 = ssub.s32 %s18, %s25
      %p79 = scmp.eq.s32.totalorder %s78, 0
      %s81 = sadd.s32 %s80, 1
      %s82 = scalar_select %p79, %s80, %s81
      %p85 = pneg %p79
      %p86 = scmp.eq.s32.totalorder %s18, 1
      %p87 = por %p85, %p86
      %p88 = scmp.ne.s32.totalorder %s80, %s83
      %p89 = scmp.eq.s32.totalorder %s18, 0
      %p90 = por %p88, %p89
      %p91 = scmp.ne.s32.totalorder %s80, %s83
      %p92 = scmp.eq.s32.totalorder %s23, 1
      %p93 = por %p91, %p92
      %p94 = scmp.ne.s32.totalorder %s83, %s84
      %p95 = scmp.eq.s32.totalorder %s23, 0
      %p96 = por %p94, %p95
      %p97 = scmp.ne.s32.totalorder %s83, %s84
      %p98 = scmp.eq.s32.totalorder %s24, 1
      %p99 = por %p97, %p98
      %p101 = scmp.ne.s32.totalorder %s84, %s100
      %p102 = scmp.eq.s32.totalorder %s24, 0
      %p103 = por %p101, %p102
      %s104 = ssub.s32 %s18, %s25
      %p105 = scmp.eq.s32.totalorder %s104, 0
      %s107 = sadd.s32 %s106, 1
      %s108 = scalar_select %p105, %s106, %s107
      %p111 = pneg %p105
      %p112 = scmp.eq.s32.totalorder %s18, 1
      %p113 = por %p111, %p112
      %p114 = scmp.ne.s32.totalorder %s106, %s109
      %p115 = scmp.eq.s32.totalorder %s18, 0
      %p116 = por %p114, %p115
      %p117 = scmp.ne.s32.totalorder %s106, %s109
      %p118 = scmp.eq.s32.totalorder %s23, 1
      %p119 = por %p117, %p118
      %p120 = scmp.ne.s32.totalorder %s109, %s110
      %p121 = scmp.eq.s32.totalorder %s23, 0
      %p122 = por %p120, %p121
      %p123 = scmp.ne.s32.totalorder %s109, %s110
      %p124 = scmp.eq.s32.totalorder %s24, 1
      %p125 = por %p123, %p124
      %p127 = scmp.ne.s32.totalorder %s110, %s126
      %p128 = scmp.eq.s32.totalorder %s24, 0
      %p129 = por %p127, %p128
      %s130 = ssub.s32 %s18, %s25
      %p131 = scmp.eq.s32.totalorder %s130, 0
      %s133 = sadd.s32 %s132, 1
      %s134 = scalar_select %p131, %s132, %s133
      %p137 = pneg %p131
      %p138 = scmp.eq.s32.totalorder %s18, 1
      %p139 = por %p137, %p138
      %p140 = scmp.ne.s32.totalorder %s132, %s135
      %p141 = scmp.eq.s32.totalorder %s18, 0
      %p142 = por %p140, %p141
      %p143 = scmp.ne.s32.totalorder %s132, %s135
      %p144 = scmp.eq.s32.totalorder %s23, 1
      %p145 = por %p143, %p144
      %p146 = scmp.ne.s32.totalorder %s135, %s136
      %p147 = scmp.eq.s32.totalorder %s23, 0
      %p148 = por %p146, %p147
      %p149 = scmp.ne.s32.totalorder %s135, %s136
      %p150 = scmp.eq.s32.totalorder %s24, 1
      %p151 = por %p149, %p150
      %p153 = scmp.ne.s32.totalorder %s136, %s152
      %p154 = scmp.eq.s32.totalorder %s24, 0
      %p155 = por %p153, %p154
      %s156 = ssub.s32 %s18, %s25
      %p157 = scmp.eq.s32.totalorder %s156, 0
      %s159 = sadd.s32 %s158, 1
      %s160 = scalar_select %p157, %s158, %s159
      %p163 = pneg %p157
      %p164 = scmp.eq.s32.totalorder %s18, 1
      %p165 = por %p163, %p164
      %p166 = scmp.ne.s32.totalorder %s158, %s161
      %p167 = scmp.eq.s32.totalorder %s18, 0
      %p168 = por %p166, %p167
      %p169 = scmp.ne.s32.totalorder %s158, %s161
      %p170 = scmp.eq.s32.totalorder %s23, 1
      %p171 = por %p169, %p170
      %p172 = scmp.ne.s32.totalorder %s161, %s162
      %p173 = scmp.eq.s32.totalorder %s23, 0
      %p174 = por %p172, %p173
      %p175 = scmp.ne.s32.totalorder %s161, %s162
      %p176 = scmp.eq.s32.totalorder %s24, 1
      %p177 = por %p175, %p176
      %p179 = scmp.ne.s32.totalorder %s162, %s178
      %p180 = scmp.eq.s32.totalorder %s24, 0
      %p181 = por %p179, %p180
      %p182 = scmp.le.s32.totalorder 1, %s18
      %p183 = scmp.lt.s32.totalorder %s18, 3
      %p184 = pnand %p182, %p183
      %p185 = pneg %p184
      // Predicated region
      $region9: #{tpu_custom_call.1} parent=5 // pred_check
        _
      $region10: #{tpu_custom_call.1} parent=5 // pred_check_branch
        %187 = sbr.rel (%p184) target = $region12
      $region11: #{tpu_custom_call.1} parent=5 // pred_region
        %s188 = ssub.s32 %s18, 1
      $region12: #{tpu_custom_call.1} parent=5 // pred_fallthru
        _
      %p189 = scmp.lt.s32.totalorder %s18, 2
      // Predicated region
      $region13: #{tpu_custom_call.1} parent=5 // pred_check
        %p190 = pneg %p189
      $region14: #{tpu_custom_call.1} parent=5 // pred_check_branch
        %192 = sbr.rel (%p190) target = $region16
      $region15: #{tpu_custom_call.1} parent=5 // pred_region
        // Predicated region
        $region17: #{tpu_custom_call.1} parent=15 // pred_check
          %p193 = pneg %p38
        $region18: #{tpu_custom_call.1} parent=15 // pred_check_branch
          %195 = sbr.rel (%p193) target = $region20
        $region19: #{tpu_custom_call.1} parent=15 // pred_region
          %s196 = smul.u32 2, %s18
          %p197 = scmp.lt.s32.totalorder %s196, 3
          %s198 = scalar_select %p197, %s196, 3
          %s199 = smul.addr %s198, 2
          %s200 = smul.addr %s199, 4
          %s201 = scalar_lea.vmem %s0, %s200
          %s202 = smul.u32 2, %s18
        $region20: #{tpu_custom_call.1} parent=15 // pred_fallthru
          _
        // Predicated region
        $region21: #{tpu_custom_call.1} parent=15 // pred_check
          %p203 = pneg %p64
        $region22: #{tpu_custom_call.1} parent=15 // pred_check_branch
          %205 = sbr.rel (%p203) target = $region24
        $region23: #{tpu_custom_call.1} parent=15 // pred_region
          %s206 = smul.u32 2, %s18
          %p207 = scmp.lt.s32.totalorder %s206, 3
          %s208 = scalar_select %p207, %s206, 3
          %s209 = smul.addr %s208, 2
          %s210 = scalar_lea.vmem %s1, %s209
          %s211 = smul.u32 2, %s18
        $region24: #{tpu_custom_call.1} parent=15 // pred_fallthru
          _
        // Predicated region
        $region25: #{tpu_custom_call.1} parent=15 // pred_check
          %p212 = pneg %p90
        $region26: #{tpu_custom_call.1} parent=15 // pred_check_branch
          %214 = sbr.rel (%p212) target = $region28
        $region27: #{tpu_custom_call.1} parent=15 // pred_region
          %s215 = smul.u32 2, %s18
          %p216 = scmp.lt.s32.totalorder %s215, 3
          %s217 = scalar_select %p216, %s215, 3
          %s218 = smul.addr %s217, 2
          %s219 = smul.addr %s218, 4
          %s220 = scalar_lea.vmem %s2, %s219
          %s221 = smul.u32 2, %s18
        $region28: #{tpu_custom_call.1} parent=15 // pred_fallthru
          _
        // Predicated region
        $region29: #{tpu_custom_call.1} parent=15 // pred_check
          %p222 = pneg %p116
        $region30: #{tpu_custom_call.1} parent=15 // pred_check_branch
          %224 = sbr.rel (%p222) target = $region32
        $region31: #{tpu_custom_call.1} parent=15 // pred_region
          %s225 = smul.u32 2, %s18
          %p226 = scmp.lt.s32.totalorder %s225, 3
          %s227 = scalar_select %p226, %s225, 3
          %s228 = smul.addr %s227, 2
          %s229 = scalar_lea.vmem %s3, %s228
          %s230 = smul.u32 2, %s18
        $region32: #{tpu_custom_call.1} parent=15 // pred_fallthru
          _
      $region16: #{tpu_custom_call.1} parent=5 // pred_fallthru
        _
      %p231 = scmp.le.s32.totalorder 1, %s18
      %p232 = scmp.lt.s32.totalorder %s18, 3
      %p233 = pnand %p231, %p232
      %p234 = pneg %p233
      // Predicated region
      $region33: #{tpu_custom_call.1} parent=5 // pred_check
        _
      $region34: #{tpu_custom_call.1} parent=5 // pred_check_branch
        %236 = sbr.rel (%p233) target = $region36
      $region35: #{tpu_custom_call.1} parent=5 // pred_region
        %s237 = ssub.s32 %s18, 1
        %s238 = smul.u32 2, %s23
        %p239 = scmp.lt.s32.totalorder %s238, 3
        %s240 = scalar_select %p239, %s238, 3
        %s241 = smul.addr %s240, 2
        %s242 = smul.addr %s241, 4
        %s243 = scalar_lea.vmem %s0, %s242
        %p244 = pneg %p44
        %p245 = pneg %p41
        %s246 = smul.u32 2, %s23
        %p247 = scmp.lt.s32.totalorder %s246, 3
        %s248 = scalar_select %p247, %s246, 3
        %s249 = smul.addr %s248, 2
        %s250 = scalar_lea.vmem %s1, %s249
        %p251 = pneg %p70
        %p252 = pneg %p67
        %s253 = smul.u32 2, %s23
        %p254 = scmp.lt.s32.totalorder %s253, 3
        %s255 = scalar_select %p254, %s253, 3
        %s256 = smul.addr %s255, 2
        %s257 = smul.addr %s256, 4
        %s258 = scalar_lea.vmem %s2, %s257
        %p259 = pneg %p96
        %p260 = pneg %p93
        %s261 = smul.u32 2, %s23
        %p262 = scmp.lt.s32.totalorder %s261, 3
        %s263 = scalar_select %p262, %s261, 3
        %s264 = smul.addr %s263, 2
        %s265 = scalar_lea.vmem %s3, %s264
        %p266 = pneg %p122
        %p267 = pneg %p119
        %p268 = pneg %p148
        %p269 = pneg %p145
        %s270 = sand.u32 %s135, 1
        %s271 = scalar_lea.sflag [#allocation3], %s270
        %s272 = sand.u32 %s135, 1
        %s273 = smul.addr %s272, 16
        %s274 = scalar_lea.vmem [#allocation2], %s273
        %p275 = pneg %p174
        %p276 = pneg %p171
        %s277 = sand.u32 %s161, 1
        %s278 = scalar_lea.sflag [#allocation5], %s277
        %s279 = sand.u32 %s161, 1
        %s280 = smul.addr %s279, 16
        %s281 = scalar_lea.vmem [#allocation4], %s280
        %s282 = smul.u32 2, %s23
        %p283 = scmp.lt.s32.totalorder %s282, 3
        %s284 = scalar_select %p283, %s282, 3
        %s285 = smul.addr %s284, 2
        %s286 = smul.addr %s285, 4
        %s287 = scalar_lea.vmem %s0, %s286
        %s288 = smul.u32 2, %s23
        %s289 = smul.u32 2, %s23
        %p290 = scmp.lt.s32.totalorder %s289, 3
        %s291 = scalar_select %p290, %s289, 3
        %s292 = smul.addr %s291, 2
        %s293 = scalar_lea.vmem %s1, %s292
        %s294 = smul.u32 2, %s23
        %s295 = smul.u32 2, %s23
        %p296 = scmp.lt.s32.totalorder %s295, 3
        %s297 = scalar_select %p296, %s295, 3
        %s298 = smul.addr %s297, 2
        %s299 = smul.addr %s298, 4
        %s300 = scalar_lea.vmem %s2, %s299
        %s301 = smul.u32 2, %s23
        %s302 = smul.u32 2, %s23
        %p303 = scmp.lt.s32.totalorder %s302, 3
        %s304 = scalar_select %p303, %s302, 3
        %s305 = smul.addr %s304, 2
        %s306 = scalar_lea.vmem %s3, %s305
        %s307 = smul.u32 2, %s23
        %s308 = smul.u32 2, %s23
        %s309 = smul.u32 2, %s23
        %v310 = vld [vmem:[%s287] sm:$0x77]
        %v311 = vld [vmem:[%s287 + $0x8] sm:$0x77]
        %312 = vst [vmem:[%s274] sm:$0x77] %v310
        %313 = vst [vmem:[%s274 + $0x8] sm:$0x77] %v311
        %v314 = vld [vmem:[%s293] sm:$0x3]
        %v315 = vld [vmem:[%s293 + $0x2] sm:$0x3]
        %v316 = vsub.f32 %v314, 5.0
        %v317 = vsub.f32 %v315, 5.0
        %v318 = vrcp.pop 1.667
        %v319 = vmul.f32 %v316, %v318
        %v320 = vmul.f32 %v317, %v318
        %v321 = vlaneseq
        %vm322 = vcmp.ge.s32.totalorder %v321, 0
        %vm323 = vcmp.lt.s32.totalorder %v321, 256
        %vm324 = vmand %vm322, %vm323
        %s325 = scalar_lea.vmem %s274, 3 [#allocation2]
        %326 = vst.msk [vmem:[%s325] ss:$4 sm:$0x3] %vm324, %v319
        %s327 = scalar_lea.vmem %s274, 11 [#allocation2]
        %328 = vst.msk [vmem:[%s327] ss:$4 sm:$0x3] %vm324, %v320
        %v329 = vld [vmem:[%s300] sm:$0x77]
        %v330 = vld [vmem:[%s300 + $0x8] sm:$0x77]
        %331 = vst [vmem:[%s281] sm:$0x77] %v329
        %332 = vst [vmem:[%s281 + $0x8] sm:$0x77] %v330
        %v333 = vld [vmem:[%s306] sm:$0x3]
        %v334 = vld [vmem:[%s306 + $0x2] sm:$0x3]
        %v335 = vsub.f32 %v333, 5.0
        %v336 = vsub.f32 %v334, 5.0
        %v337 = vmul.f32 %v335, %v318
        %v338 = vmul.f32 %v336, %v318
        %s339 = scalar_lea.vmem %s281, 3 [#allocation4]
        %340 = vst.msk [vmem:[%s339] ss:$4 sm:$0x3] %vm324, %v337
        %s341 = scalar_lea.vmem %s281, 11 [#allocation4]
        %342 = vst.msk [vmem:[%s341] ss:$4 sm:$0x3] %vm324, %v338
        %s343 = sand.u32 %s135, 1
        %s344 = scalar_lea.sflag [#allocation3], %s343
        %s345 = sand.u32 %s135, 1
        %s346 = smul.addr %s345, 16
        %s347 = scalar_lea.vmem [#allocation2], %s346
        %s348 = sand.u32 %s161, 1
        %s349 = scalar_lea.sflag [#allocation5], %s348
        %s350 = sand.u32 %s161, 1
        %s351 = smul.addr %s350, 16
        %s352 = scalar_lea.vmem [#allocation4], %s351
        // Predicated region
        $region37: #{tpu_custom_call.1} parent=35 // pred_check
          %p353 = pneg %p145
        $region38: #{tpu_custom_call.1} parent=35 // pred_check_branch
          %355 = sbr.rel (%p353) target = $region40
        $region39: #{tpu_custom_call.1} parent=35 // pred_region
          %s356 = smul.u32 2, %s23
          %s358 = ssub.s32 256, 256
          %359 = vsyncadd %s344, %s358
          %s360 = smul.addr %s356, 2
          %s361 = smul.addr %s360, 64
          %s362 = scalar_lea.hbm %s4, %s361
          %s363 = sshll.u32 %s347, 4
          %s364 = int_to_ptr.vmem [resolvable:$true] %s363
          %369 = dma.vmem_to_hbm [thread:$0]  %s364, 256, %s362, %s344, 128, 128, 8
        $region40: #{tpu_custom_call.1} parent=35 // pred_fallthru
          _
        // Predicated region
        $region41: #{tpu_custom_call.1} parent=35 // pred_check
          %p370 = pneg %p171
        $region42: #{tpu_custom_call.1} parent=35 // pred_check_branch
          %372 = sbr.rel (%p370) target = $region44
        $region43: #{tpu_custom_call.1} parent=35 // pred_region
          %s373 = smul.u32 2, %s23
          %s375 = ssub.s32 256, 256
          %376 = vsyncadd %s349, %s375
          %s377 = smul.addr %s373, 2
          %s378 = smul.addr %s377, 64
          %s379 = scalar_lea.hbm %s5, %s378
          %s380 = sshll.u32 %s352, 4
          %s381 = int_to_ptr.vmem [resolvable:$true] %s380
          %386 = dma.vmem_to_hbm [thread:$0]  %s381, 256, %s379, %s349, 128, 128, 8
        $region44: #{tpu_custom_call.1} parent=35 // pred_fallthru
          _
      $region36: #{tpu_custom_call.1} parent=5 // pred_fallthru
        _
      %p387 = scmp.le.s32.totalorder 2, %s18
      // Predicated region
      $region45: #{tpu_custom_call.1} parent=5 // pred_check
        %p388 = pneg %p387
      $region46: #{tpu_custom_call.1} parent=5 // pred_check_branch
        %390 = sbr.rel (%p388) target = $region48
      $region47: #{tpu_custom_call.1} parent=5 // pred_region
        %s391 = ssub.s32 %s18, 2
        // Predicated region
        $region49: #{tpu_custom_call.1} parent=47 // pred_check
          %p392 = pneg %p151
        $region50: #{tpu_custom_call.1} parent=47 // pred_check_branch
          %394 = sbr.rel (%p392) target = $region52
        $region51: #{tpu_custom_call.1} parent=47 // pred_region
          %s395 = sand.u32 %s136, 1
          %s396 = scalar_lea.sflag [#allocation3], %s395
          %s397 = sand.u32 %s136, 1
          %s398 = smul.addr %s397, 16
          %s399 = scalar_lea.vmem [#allocation2], %s398
          %400 = dma.done %s396, 256
        $region52: #{tpu_custom_call.1} parent=47 // pred_fallthru
          _
        // Predicated region
        $region53: #{tpu_custom_call.1} parent=47 // pred_check
          %p401 = pneg %p177
        $region54: #{tpu_custom_call.1} parent=47 // pred_check_branch
          %403 = sbr.rel (%p401) target = $region56
        $region55: #{tpu_custom_call.1} parent=47 // pred_region
          %s404 = sand.u32 %s162, 1
          %s405 = scalar_lea.sflag [#allocation5], %s404
          %s406 = sand.u32 %s162, 1
          %s407 = smul.addr %s406, 16
          %s408 = scalar_lea.vmem [#allocation4], %s407
          %409 = dma.done %s405, 256
        $region56: #{tpu_custom_call.1} parent=47 // pred_fallthru
          _
      $region48: #{tpu_custom_call.1} parent=5 // pred_fallthru
        _
    $region6: #{tpu_custom_call.1} parent=1 // loop_footer
      %s22 = sadd.s32 1, %s18
    $region7: #{tpu_custom_call.1} parent=1 // loop_footer_branch
      %17 = sbr.rel target = $region3
    $region8: #{tpu_custom_call.1} parent=1 // loop_exit
      _
    %410 = vsyncpa [#allocation3], 1
    %s411 = scalar_lea.sflag [#allocation3], 1
    %412 = vsyncpa %s411, 1
    %413 = vsyncpa [#allocation5], 1
    %s414 = scalar_lea.sflag [#allocation5], 1
    %415 = vsyncpa %s414, 1

</llo_original>
